<compile_context>
chip_gen: v5e
topology: v5e:2x2
jax: 0.10.0
libtpu: 0.0.40
codegen_flags: <defaults>
</compile_context>

<pallas_src>
import jax
import jax.numpy as jnp
from jax.experimental import pallas as pl
from jax.experimental.pallas import tpu as pltpu


def _round_up(a, b):
    return (a + b - 1) // b * b


def _masked_cumsum_kernel(tri_ref, x_ref, m_ref, o_ref, carry_ref):
    # Grid = (batch_tiles, seq_chunks); seq chunk index is the inner,
    # "arbitrary" axis that carries the running per-row sum.
    k = pl.program_id(1)

    @pl.when(k == 0)
    def _():
        carry_ref[...] = jnp.zeros_like(carry_ref)

    # Apply the boolean mask with a single multiply (no zeros tile).
    xm = x_ref[...] * m_ref[...].astype(x_ref.dtype)

    # In-chunk prefix sum on the MXU: partial[:, j] = sum_{i<=j} xm[:, i].
    partial = jnp.dot(xm, tri_ref[...], preferred_element_type=jnp.float32)

    # Add the carry from previous chunks, then update the carry with this
    # chunk's total per row.
    o_ref[...] = (carry_ref[...] + partial).astype(o_ref.dtype)
    carry_ref[...] = carry_ref[...] + jnp.sum(xm, axis=-1, keepdims=True)


def masked_cumsum(x, mask, dim=1):
    """Pallas TPU masked cumsum along dim=1 (matches the CUDA kernel)."""
    assert dim == 1, "kernel implements cumsum along the last (seq) axis"
    B, L = x.shape

    # Batch tile: multiple of 32 (packed-bool sublane tiling), big enough to
    # feed the MXU; 256 for large B so v7x's two TensorCores both get work.
    if B >= 512:
        bm = 256
    else:
        bm = min(128, _round_up(B, 32))
    B_pad = _round_up(B, bm)

    # Sequence chunk: multiple of 128 lanes, capped so the triangular matrix
    # (TL x TL f32) stays ~1 MiB and the kernel scales to long sequences.
    TL = min(512, _round_up(L, 128))
    L_pad = _round_up(L, TL)

    if (B_pad, L_pad) != (B, L):
        x = jnp.pad(x, ((0, B_pad - B), (0, L_pad - L)))
        mask = jnp.pad(mask, ((0, B_pad - B), (0, L_pad - L)))

    # Inclusive upper-triangular ones matrix, built once outside the kernel.
    tri = jnp.triu(jnp.ones((TL, TL), dtype=x.dtype))

    grid = (B_pad // bm, L_pad // TL)
    out = pl.pallas_call(
        _masked_cumsum_kernel,
        out_shape=jax.ShapeDtypeStruct((B_pad, L_pad), x.dtype),
        grid_spec=pltpu.PrefetchScalarGridSpec(
            num_scalar_prefetch=0,
            grid=grid,
            in_specs=[
                pl.BlockSpec((TL, TL), lambda i, k: (0, 0)),  # resident T
                pl.BlockSpec((bm, TL), lambda i, k: (i, k)),  # x chunk
                pl.BlockSpec((bm, TL), lambda i, k: (i, k)),  # mask chunk
            ],
            out_specs=pl.BlockSpec((bm, TL), lambda i, k: (i, k)),
            scratch_shapes=[pltpu.VMEM((bm, 1), jnp.float32)],
        ),
        compiler_params=pltpu.CompilerParams(
            dimension_semantics=("parallel", "arbitrary"),
        ),
    )(tri, x, mask)

    if (B_pad, L_pad) != (B, L):
        out = out[:B, :L]
    return out


if __name__ == "__main__":
    key = jax.random.PRNGKey(0)

    # Test 1: small shape (single batch tile, single seq chunk).
    k1, k2, k3, k4 = jax.random.split(key, 4)
    B, L = 8, 128
    x = jax.random.normal(k1, (B, L), dtype=jnp.float32)
    mask = jax.random.bernoulli(k2, p=0.5, shape=(B, L))
    out = jax.block_until_ready(masked_cumsum(x, mask, dim=1))
    ref = jnp.cumsum(jnp.where(mask, x, 0.0), axis=1)
    assert out.shape == (B, L) and out.dtype == jnp.float32
    assert jnp.allclose(out, ref, atol=1e-4, rtol=1e-4)

    # Test 2: ragged batch + multi-chunk sequence (exercises padding + carry).
    B2, L2 = 5, 1024
    x2 = jax.random.normal(k3, (B2, L2), dtype=jnp.float32)
    mask2 = jax.random.bernoulli(k4, p=0.5, shape=(B2, L2))
    out2 = jax.block_until_ready(masked_cumsum(x2, mask2, dim=1))
    ref2 = jnp.cumsum(jnp.where(mask2, x2, 0.0), axis=1)
    assert out2.shape == (B2, L2)
    assert jnp.allclose(out2, ref2, atol=1e-3, rtol=1e-4)

    print("KERNEL_OK")
</pallas_src>

<mosaic_0001>
module attributes {stable_mosaic.version = 11 : i64} {
  func.func @_masked_cumsum_kernel(%arg0: i32, %arg1: i32, %arg2: memref<128x128xf32, #tpu.memory_space<vmem>>, %arg3: memref<32x128xf32, #tpu.memory_space<vmem>>, %arg4: memref<32x128xi32, #tpu.memory_space<vmem>>, %arg5: memref<32x128xf32, #tpu.memory_space<vmem>>, %arg6: memref<32x1xf32, #tpu.memory_space<vmem>>) attributes {dimension_semantics = [#tpu.dimension_semantics<parallel>, #tpu.dimension_semantics<arbitrary>], iteration_bounds = array<i64: 1, 1>, scalar_prefetch = 0 : i64, scratch_operands = 1 : i64, tpu.core_type = #tpu.core_type<tc>, window_params = [{pipeline_mode = #tpu.pipeline_mode<synchronous>, transform_indices = @transform_0, window_bounds = array<i64: 128, 128>}, {transform_indices = @transform_1, window_bounds = array<i64: 32, 128>}, {transform_indices = @transform_2, window_bounds = array<i64: 32, 128>}, {transform_indices = @transform_3, window_bounds = array<i64: 32, 128>}]} {
    %c0_i32 = arith.constant 0 : i32
    %0 = arith.cmpi eq, %arg1, %c0_i32 : i32
    %1 = arith.extui %0 : i1 to i32
    %c0_i32_0 = arith.constant 0 : i32
    %2 = arith.cmpi ne, %1, %c0_i32_0 : i32
    scf.if %2 {
      %cst_16 = arith.constant 0.000000e+00 : f32
      %20 = vector.broadcast %cst_16 : f32 to vector<32x1xf32>
      %c0_17 = arith.constant 0 : index
      %c0_18 = arith.constant 0 : index
      %21 = vector.load %arg6[%c0_17, %c0_18] : memref<32x1xf32, #tpu.memory_space<vmem>>, vector<32x1xf32>
      tpu.vector_store %arg6[%c0_17, %c0_18], %20 {strides = array<i32>} : memref<32x1xf32, #tpu.memory_space<vmem>>, vector<32x1xf32>,
    } else {
    }
    %c0 = arith.constant 0 : index
    %c0_1 = arith.constant 0 : index
    %3 = vector.load %arg3[%c0, %c0_1] : memref<32x128xf32, #tpu.memory_space<vmem>>, vector<32x128xf32>
    %c0_2 = arith.constant 0 : index
    %c0_3 = arith.constant 0 : index
    %4 = vector.load %arg4[%c0_2, %c0_3] : memref<32x128xi32, #tpu.memory_space<vmem>>, vector<32x128xi32>
    %cst = arith.constant dense<0> : vector<32x128xi32>
    %5 = arith.cmpi ne, %4, %cst : vector<32x128xi32>
    %6 = arith.extui %5 : vector<32x128xi1> to vector<32x128xi32>
    %7 = arith.sitofp %6 : vector<32x128xi32> to vector<32x128xf32>
    %8 = arith.mulf %3, %7 : vector<32x128xf32>
    %c0_4 = arith.constant 0 : index
    %c0_5 = arith.constant 0 : index
    %9 = vector.load %arg2[%c0_4, %c0_5] : memref<128x128xf32, #tpu.memory_space<vmem>>, vector<128x128xf32>
    %cst_6 = arith.constant dense<0.000000e+00> : vector<32x128xf32>
    %10 = tpu.matmul %8, %9, %cst_6 {dimension_numbers = #tpu.dot_dimension_numbers<[1], [0], [0], [1], [0, 0, 1, 1], [], []>} : vector<32x128xf32>, vector<128x128xf32>, vector<32x128xf32> -> vector<32x128xf32>
    %c0_7 = arith.constant 0 : index
    %c0_8 = arith.constant 0 : index
    %11 = vector.load %arg6[%c0_7, %c0_8] : memref<32x1xf32, #tpu.memory_space<vmem>>, vector<32x1xf32>
    %12 = vector.broadcast %11 : vector<32x1xf32> to vector<32x128xf32>
    %13 = arith.addf %12, %10 : vector<32x128xf32>
    %c0_9 = arith.constant 0 : index
    %c0_10 = arith.constant 0 : index
    %14 = vector.load %arg5[%c0_9, %c0_10] : memref<32x128xf32, #tpu.memory_space<vmem>>, vector<32x128xf32>
    tpu.vector_store %arg5[%c0_9, %c0_10], %13 {strides = array<i32>} : memref<32x128xf32, #tpu.memory_space<vmem>>, vector<32x128xf32>,
    %c0_11 = arith.constant 0 : index
    %c0_12 = arith.constant 0 : index
    %15 = vector.load %arg6[%c0_11, %c0_12] : memref<32x1xf32, #tpu.memory_space<vmem>>, vector<32x1xf32>
    %cst_13 = arith.constant dense<0.000000e+00> : vector<32xf32>
    %16 = vector.multi_reduction <add>, %8, %cst_13 [1] : vector<32x128xf32> to vector<32xf32>
    %17 = vector.shape_cast %16 : vector<32xf32> to vector<32x1xf32>
    %18 = arith.addf %15, %17 : vector<32x1xf32>
    %c0_14 = arith.constant 0 : index
    %c0_15 = arith.constant 0 : index
    %19 = vector.load %arg6[%c0_14, %c0_15] : memref<32x1xf32, #tpu.memory_space<vmem>>, vector<32x1xf32>
    tpu.vector_store %arg6[%c0_14, %c0_15], %18 {strides = array<i32>} : memref<32x1xf32, #tpu.memory_space<vmem>>, vector<32x1xf32>,
    return
  }
  func.func @transform_0(%arg0: i32, %arg1: i32) -> (i32, i32) {
    %c0_i32 = arith.constant 0 : i32
    %c0_i32_0 = arith.constant 0 : i32
    %c0_i32_1 = arith.constant 0 : i32
    return %c0_i32, %c0_i32_0 : i32, i32
  }
  func.func @transform_1(%arg0: i32, %arg1: i32) -> (i32, i32) {
    %c0_i32 = arith.constant 0 : i32
    return %arg0, %arg1 : i32, i32
  }
  func.func @transform_2(%arg0: i32, %arg1: i32) -> (i32, i32) {
    %c0_i32 = arith.constant 0 : i32
    return %arg0, %arg1 : i32, i32
  }
  func.func @transform_3(%arg0: i32, %arg1: i32) -> (i32, i32) {
    %c0_i32 = arith.constant 0 : i32
    return %arg0, %arg1 : i32, i32
  }
}

</mosaic_0001>

<llo_original>
// kernel: tpu_custom_call.1
$region0: #{tpu_custom_call.1}
  #allocation0 [shape = 'u32[]', space=smem, size = 0x4, offset = 0x4, fixed_abs, tag = 'smem constant byte address 0x4 - core index']
  #allocation1 [shape = 'u32[72,128]{1,0:T(1,128)}', space=vmem, size = 0x9000, scoped, tag = 'internal scratch']
  #allocation2 [shape = 'f32[32,1]{1,0:T(8,128)}', space=vmem, size = 0x4000, scoped, tag = 'scratch operand']
  %s0 = inlined_call_operand.hbm [shape: f32[128,128], index: 0, kind: input, shape index: {}]
  %s1 = inlined_call_operand.vmem [shape: f32[32,128], index: 1, kind: input, shape index: {}]
  %s2 = inlined_call_operand.vmem [shape: s32[32,128], index: 2, kind: input, shape index: {}]
  %s3 = inlined_call_operand.hbm [shape: f32[32,128], index: 3, kind: output, shape index: {}]
  %s4 = sld [smem:[#allocation0]]
  $region30: #{tpu_custom_call.1} parent=0
    _
  %s6 = ssub.s32 1, %s4
  %s7 = scalar_select 0, %s6, %s4
  $region1: #{tpu_custom_call.1} parent=0
    #allocation3 [shape = 'u8[65536]{0}', space=vmem, size = 0x10000, scoped, tag = 'input window, operand 0, single buffered']
    #allocation4 [shape = 's32[1]{0}', space=sflag, size = 0x4, scoped, tag = 'scoped memory for tpu_custom_call.1']
    #allocation5 [shape = 's32[1]{0}', space=sflag, size = 0x4, scoped, tag = 'scoped memory for tpu_custom_call.1']
    #allocation6 [shape = 'u8[16384]{0}', space=vmem, size = 0x4000, scoped, tag = 'output window, operand 0, single buffered']
    %8 = vsyncpa [#allocation4], 0
    %9 = vsyncpa [#allocation5], 0
    // Predicated region
    $region2: #{tpu_custom_call.1} parent=1 // pred_check
      _
    $region3: #{tpu_custom_call.1} parent=1 // pred_check_branch
      %11 = sbr.rel (0) target = $region5
    $region4: #{tpu_custom_call.1} parent=1 // pred_region
      %13 = vsyncadd [#allocation4], 0
      %s14 = sshll.u32 %s0, 4
      %s15 = int_to_ptr.hbm [resolvable:$true] %s14
      %s16 = sshll.u32 [#allocation3], 4
      %s17 = int_to_ptr.vmem [resolvable:$true] %s16
      %22 = dma.hbm_to_vmem [thread:$0]  %s15, 2048, %s17, [#allocation4], 128, 128, 8
    $region5: #{tpu_custom_call.1} parent=1 // pred_fallthru
      _
    // Predicated region
    $region6: #{tpu_custom_call.1} parent=1 // pred_check
      _
    $region7: #{tpu_custom_call.1} parent=1 // pred_check_branch
      %24 = sbr.rel (0) target = $region9
    $region8: #{tpu_custom_call.1} parent=1 // pred_region
      _
    $region9: #{tpu_custom_call.1} parent=1 // pred_fallthru
      _
    // Predicated region
    $region10: #{tpu_custom_call.1} parent=1 // pred_check
      _
    $region11: #{tpu_custom_call.1} parent=1 // pred_check_branch
      %26 = sbr.rel (0) target = $region13
    $region12: #{tpu_custom_call.1} parent=1 // pred_region
      _
    $region13: #{tpu_custom_call.1} parent=1 // pred_fallthru
      _
    // Predicated region
    $region14: #{tpu_custom_call.1} parent=1 // pred_check
      _
    $region15: #{tpu_custom_call.1} parent=1 // pred_check_branch
      %28 = sbr.rel (0) target = $region17
    $region16: #{tpu_custom_call.1} parent=1 // pred_region
      %30 = dma.done [#allocation4], 2048
    $region17: #{tpu_custom_call.1} parent=1 // pred_fallthru
      _
    %p31 = scmp.eq.s32.totalorder 0, 0
    // Predicated region
    $region18: #{tpu_custom_call.1} parent=1 // pred_check
      %p32 = pneg %p31
    $region19: #{tpu_custom_call.1} parent=1 // pred_check_branch
      %34 = sbr.rel (%p32) target = $region21
    $region20: #{tpu_custom_call.1} parent=1 // pred_region
      %vm35 = vcmask 7168
      %36 = vst.msk [vmem:[#allocation2] sm:$0xff] %vm35, 0.0
      %37 = vst.msk [vmem:[#allocation2 + $0x8] sm:$0xff] %vm35, 0.0
      %38 = vst.msk [vmem:[#allocation2 + $0x10] sm:$0xff] %vm35, 0.0
      %39 = vst.msk [vmem:[#allocation2 + $0x18] sm:$0xff] %vm35, 0.0
    $region21: #{tpu_custom_call.1} parent=1 // pred_fallthru
      _
    %v40 = vld [vmem:[%s1] sm:$0xff]
    %v41 = vld [vmem:[%s1 + $0x8] sm:$0xff]
    %v42 = vld [vmem:[%s1 + $0x10] sm:$0xff]
    %v43 = vld [vmem:[%s1 + $0x18] sm:$0xff]
    %v44 = vld [vmem:[%s2] sm:$0xff]
    %v45 = vld [vmem:[%s2 + $0x8] sm:$0xff]
    %v46 = vld [vmem:[%s2 + $0x10] sm:$0xff]
    %v47 = vld [vmem:[%s2 + $0x18] sm:$0xff]
    %vm48 = vcmp.ne.s32.totalorder %v44, 0
    %vm49 = vcmp.ne.s32.totalorder %v45, 0
    %vm50 = vcmp.ne.s32.totalorder %v46, 0
    %vm51 = vcmp.ne.s32.totalorder %v47, 0
    %v52 = vsel %vm48, 1, 0
    %v53 = vsel %vm49, 1, 0
    %v54 = vsel %vm50, 1, 0
    %v55 = vsel %vm51, 1, 0
    %v56 = vcvt.s32.f32 %v52
    %v57 = vcvt.s32.f32 %v53
    %v58 = vcvt.s32.f32 %v54
    %v59 = vcvt.s32.f32 %v55
    %v60 = vmul.f32 %v40, %v56
    %v61 = vmul.f32 %v41, %v57
    %v62 = vmul.f32 %v42, %v58
    %v63 = vmul.f32 %v43, %v59
    %v64 = vld [vmem:[#allocation3] sm:$0xff]
    %v65 = vld [vmem:[#allocation3 + $0x8] sm:$0xff]
    %v66 = vld [vmem:[#allocation3 + $0x10] sm:$0xff]
    %v67 = vld [vmem:[#allocation3 + $0x18] sm:$0xff]
    %v68 = vld [vmem:[#allocation3 + $0x20] sm:$0xff]
    %v69 = vld [vmem:[#allocation3 + $0x28] sm:$0xff]
    %v70 = vld [vmem:[#allocation3 + $0x30] sm:$0xff]
    %v71 = vld [vmem:[#allocation3 + $0x38] sm:$0xff]
    %v72 = vld [vmem:[#allocation3 + $0x40] sm:$0xff]
    %v73 = vld [vmem:[#allocation3 + $0x48] sm:$0xff]
    %v74 = vld [vmem:[#allocation3 + $0x50] sm:$0xff]
    %v75 = vld [vmem:[#allocation3 + $0x58] sm:$0xff]
    %v76 = vld [vmem:[#allocation3 + $0x60] sm:$0xff]
    %v77 = vld [vmem:[#allocation3 + $0x68] sm:$0xff]
    %v78 = vld [vmem:[#allocation3 + $0x70] sm:$0xff]
    %v79 = vld [vmem:[#allocation3 + $0x78] sm:$0xff]
    %80 = vmatpush.msra.mxu0 %v79
    %81 = vmatpush.msra.mxu0 %v78
    %82 = vmatpush.msra.mxu0 %v77
    %83 = vmatpush.msra.mxu0 %v76
    %84 = vmatpush.msra.mxu0 %v75
    %85 = vmatpush.msra.mxu0 %v74
    %86 = vmatpush.msra.mxu0 %v73
    %87 = vmatpush.msra.mxu0 %v72
    %88 = vmatpush.msra.mxu0 %v71
    %89 = vmatpush.msra.mxu0 %v70
    %90 = vmatpush.msra.mxu0 %v69
    %91 = vmatpush.msra.mxu0 %v68
    %92 = vmatpush.msra.mxu0 %v67
    %93 = vmatpush.msra.mxu0 %v66
    %94 = vmatpush.msra.mxu0 %v65
    %95 = vmatpush.msra.mxu0 %v64
    %96 = vmatmul.f32.gmra.mxu0 %v60
    %v97 = vpop.f32.mrf.mxu0
    %v98 = vadd.f32 0.0, %v97
    %99 = vmatmul.f32.gmra.mxu0 %v61
    %v100 = vpop.f32.mrf.mxu0
    %v101 = vadd.f32 0.0, %v100
    %102 = vmatmul.f32.gmra.mxu0 %v62
    %v103 = vpop.f32.mrf.mxu0
    %v104 = vadd.f32 0.0, %v103
    %105 = vmatmul.f32.gmra.mxu0 %v63
    %v106 = vpop.f32.mrf.mxu0
    %v107 = vadd.f32 0.0, %v106
    %108 = vdwg.mxu0
    %v109 = vld [vmem:[#allocation2] sm:$0xff]
    %v110 = vld [vmem:[#allocation2 + $0x8] sm:$0xff]
    %v111 = vld [vmem:[#allocation2 + $0x10] sm:$0xff]
    %v112 = vld [vmem:[#allocation2 + $0x18] sm:$0xff]
    %114 = vset.pattern.permute.xlu0 0
    %115 = vperm.xlu0 %114, %v109
    %v116 = vpop.permute.xlu0 %115
    %119 = vset.pattern.permute.xlu0 0
    %120 = vperm.xlu0 %119, %v110
    %v121 = vpop.permute.xlu0 %120
    %124 = vset.pattern.permute.xlu0 0
    %125 = vperm.xlu0 %124, %v111
    %v126 = vpop.permute.xlu0 %125
    %129 = vset.pattern.permute.xlu0 0
    %130 = vperm.xlu0 %129, %v112
    %v131 = vpop.permute.xlu0 %130
    %v133 = vadd.f32 %v116, %v98
    %v134 = vadd.f32 %v121, %v101
    %v135 = vadd.f32 %v126, %v104
    %v136 = vadd.f32 %v131, %v107
    %137 = vst [vmem:[#allocation6] sm:$0xff] %v133
    %138 = vst [vmem:[#allocation6 + $0x8] sm:$0xff] %v134
    %139 = vst [vmem:[#allocation6 + $0x10] sm:$0xff] %v135
    %140 = vst [vmem:[#allocation6 + $0x18] sm:$0xff] %v136
    %v141 = vld [vmem:[#allocation2] sm:$0xff]
    %v142 = vld [vmem:[#allocation2 + $0x8] sm:$0xff]
    %v143 = vld [vmem:[#allocation2 + $0x10] sm:$0xff]
    %v144 = vld [vmem:[#allocation2 + $0x18] sm:$0xff]
    %145 = vadd.xlane.f32.xlu0 %v60
    %v146 = vpop.xlane.xlu0 %145
    %147 = vadd.xlane.f32.xlu0 %v61
    %v148 = vpop.xlane.xlu0 %147
    %149 = vadd.xlane.f32.xlu0 %v62
    %v150 = vpop.xlane.xlu0 %149
    %151 = vadd.xlane.f32.xlu0 %v63
    %v152 = vpop.xlane.xlu0 %151
    %v153 = vadd.f32 %v141, %v146
    %v154 = vadd.f32 %v142, %v148
    %v155 = vadd.f32 %v143, %v150
    %v156 = vadd.f32 %v144, %v152
    %vm157 = vcmask 7168
    %158 = vst.msk [vmem:[#allocation2] sm:$0xff] %vm157, %v153
    %159 = vst.msk [vmem:[#allocation2 + $0x8] sm:$0xff] %vm157, %v154
    %160 = vst.msk [vmem:[#allocation2 + $0x10] sm:$0xff] %vm157, %v155
    %161 = vst.msk [vmem:[#allocation2 + $0x18] sm:$0xff] %vm157, %v156
    // Predicated region
    $region22: #{tpu_custom_call.1} parent=1 // pred_check
      _
    $region23: #{tpu_custom_call.1} parent=1 // pred_check_branch
      %163 = sbr.rel (0) target = $region25
    $region24: #{tpu_custom_call.1} parent=1 // pred_region
      %165 = vsyncadd [#allocation5], 0
      %s166 = sshll.u32 [#allocation6], 4
      %s167 = int_to_ptr.vmem [resolvable:$true] %s166
      %s168 = sshll.u32 %s3, 4
      %s169 = int_to_ptr.hbm [resolvable:$true] %s168
      %174 = dma.vmem_to_hbm [thread:$0]  %s167, 512, %s169, [#allocation5], 128, 128, 8
    $region25: #{tpu_custom_call.1} parent=1 // pred_fallthru
      _
    // Predicated region
    $region26: #{tpu_custom_call.1} parent=1 // pred_check
      _
    $region27: #{tpu_custom_call.1} parent=1 // pred_check_branch
      %176 = sbr.rel (0) target = $region29
    $region28: #{tpu_custom_call.1} parent=1 // pred_region
      %178 = dma.done [#allocation5], 512
    $region29: #{tpu_custom_call.1} parent=1 // pred_fallthru
      _
    %179 = vsyncpa [#allocation4], 1
    %180 = vsyncpa [#allocation5], 1

</llo_original>
